<compile_context>
chip_gen: v7x
topology: tpu7x:2x2x1
jax: 0.10.0
libtpu: 0.0.40
codegen_flags: <defaults>
</compile_context>

<pallas_src>
import functools

import jax
import jax.numpy as jnp
from jax.experimental import pallas as pl
from jax.experimental.pallas import tpu as pltpu

HIDDEN = 128
LANE = 128
TB_TARGET = 2048          # batch tile; sized so it also fits v7x's 32 MiB scoped VMEM
NEG_BIG = -1e30           # bias for padded logit lanes -> softmax prob exactly 0


def _round_up(x, m):
    return (x + m - 1) // m * m


def actor_kernel(x_ref, w1_ref, b1_ref, w2_ref, b2_ref, w3_ref, b3_ref, out_ref):
    x = x_ref[...]                       # (TB, d_in) bf16
    # hoist biases once (JAX does not CSE broadcast_in_dim)
    b1 = b1_ref[...]                     # (1, H)     f32
    b2 = b2_ref[...]                     # (1, H)     f32
    b3 = b3_ref[...]                     # (1, OUT_P) f32

    # fc1 + relu  (bf16 operands, f32 accumulate on the MXU)
    h1 = jnp.dot(x, w1_ref[...], preferred_element_type=jnp.float32) + b1
    h1 = jnp.maximum(h1, 0.0).astype(jnp.bfloat16)

    # fc2 + relu
    h2 = jnp.dot(h1, w2_ref[...], preferred_element_type=jnp.float32) + b2
    h2 = jnp.maximum(h2, 0.0).astype(jnp.bfloat16)

    # fc3 (lane-dense padded N); padded columns carry bias = -1e30
    logits = jnp.dot(h2, w3_ref[...], preferred_element_type=jnp.float32) + b3

    # numerically stable softmax in f32; padded lanes -> exp(~-1e30) == 0.
    # Exact divide so rows sum to 1 (within f32/bf16 rounding) for downstream samplers.
    m = jnp.max(logits, axis=-1, keepdims=True)
    e = jnp.exp(logits - m)
    denom = jnp.sum(e, axis=-1, keepdims=True)
    out_ref[...] = (e / denom).astype(out_ref.dtype)   # store bf16


def _choose_batch_tile(B):
    if B > 256:
        # >= 2 balanced tiles so "parallel" actually distributes across v7x's 2 TCs
        return min(TB_TARGET, _round_up(pl.cdiv(B, 2), 16))
    return min(TB_TARGET, _round_up(B, 16))


@functools.partial(jax.jit, static_argnames=("output_dim",))
def actor_forward(x, padded_params, output_dim):
    """x: [B, d_in] float32. padded_params: dict from pad_params(). Returns [B, output_dim] f32."""
    B, d_in = x.shape
    out_p = padded_params["w3"].shape[1]

    tb = _choose_batch_tile(B)
    n_tiles = pl.cdiv(B, tb)
    b_pad = n_tiles * tb

    # Only pad the batch (no feature padding); cast to bf16 for the MXU.
    # Under jit the pad + convert fuse into a single pass.
    x_p = jnp.pad(x, ((0, b_pad - B), (0, 0))).astype(jnp.bfloat16)

    grid_spec = pltpu.PrefetchScalarGridSpec(
        num_scalar_prefetch=0,
        grid=(n_tiles,),
        in_specs=[
            pl.BlockSpec((tb, d_in), lambda i: (i, 0)),           # x tile (full d_in)
            pl.BlockSpec((d_in, HIDDEN), lambda i: (0, 0)),       # w1 (resident)
            pl.BlockSpec((1, HIDDEN), lambda i: (0, 0)),          # b1
            pl.BlockSpec((HIDDEN, HIDDEN), lambda i: (0, 0)),     # w2
            pl.BlockSpec((1, HIDDEN), lambda i: (0, 0)),          # b2
            pl.BlockSpec((HIDDEN, out_p), lambda i: (0, 0)),      # w3 (padded N)
            pl.BlockSpec((1, out_p), lambda i: (0, 0)),           # b3 (-1e30 on pad lanes)
        ],
        out_specs=pl.BlockSpec((tb, out_p), lambda i: (i, 0)),
    )

    out = pl.pallas_call(
        actor_kernel,
        out_shape=jax.ShapeDtypeStruct((b_pad, out_p), jnp.bfloat16),
        grid_spec=grid_spec,
        compiler_params=pltpu.CompilerParams(
            dimension_semantics=("parallel",),      # shard batch tiles across TCs on v7x
            vmem_limit_bytes=32 * 1024 * 1024,      # plenty for TB=2048; safe on v7x
        ),
    )(
        x_p,
        padded_params["w1"], padded_params["b1"],
        padded_params["w2"], padded_params["b2"],
        padded_params["w3"], padded_params["b3"],
    )
    # TODO(synk): if the consumer (argmax / categorical sample) is known, fuse it into the
    # kernel and shrink the output instead of slicing the padded probabilities here.
    return out[:B, :output_dim].astype(jnp.float32)


def init_params(key, input_dim, output_dim):
    """Unpadded f32 params mimicking nn.Linear default init.
    Weights pre-transposed as [in, out]; biases as [1, out]."""
    ks = jax.random.split(key, 6)

    def linear(kw, kb, fan_in, fan_out):
        bound = 1.0 / jnp.sqrt(float(fan_in))
        w = jax.random.uniform(kw, (fan_in, fan_out), jnp.float32, -bound, bound)
        b = jax.random.uniform(kb, (1, fan_out), jnp.float32, -bound, bound)
        return w, b

    w1, b1 = linear(ks[0], ks[1], input_dim, HIDDEN)
    w2, b2 = linear(ks[2], ks[3], HIDDEN, HIDDEN)
    w3, b3 = linear(ks[4], ks[5], HIDDEN, output_dim)
    return {"w1": w1, "b1": b1, "w2": w2, "b2": b2, "w3": w3, "b3": b3}


def pad_params(params):
    """Cast weights to bf16; pad only the fc3 output (lane) dim. Done once, outside the kernel."""
    output_dim = params["w3"].shape[1]
    out_p = _round_up(max(output_dim, 1), LANE)

    w1 = params["w1"].astype(jnp.bfloat16)                      # (d_in, 128), no padding
    w2 = params["w2"].astype(jnp.bfloat16)
    w3 = jnp.pad(params["w3"], ((0, 0), (0, out_p - output_dim))).astype(jnp.bfloat16)
    b1 = params["b1"].astype(jnp.float32)
    b2 = params["b2"].astype(jnp.float32)
    # padded logit lanes get a huge negative bias so softmax gives them exactly 0
    b3 = jnp.pad(params["b3"].astype(jnp.float32),
                 ((0, 0), (0, out_p - output_dim)),
                 constant_values=NEG_BIG)
    return {"w1": w1, "b1": b1, "w2": w2, "b2": b2, "w3": w3, "b3": b3}


def reference_forward(x, params):
    """Numerics-matched reference: bf16-rounded matmul operands, f32 accumulate/softmax."""
    q = lambda a: a.astype(jnp.bfloat16).astype(jnp.float32)
    h1 = jnp.maximum(q(x) @ q(params["w1"]) + params["b1"], 0.0)
    h2 = jnp.maximum(q(h1) @ q(params["w2"]) + params["b2"], 0.0)
    logits = q(h2) @ q(params["w3"]) + params["b3"]
    return jax.nn.softmax(logits, axis=-1)


if __name__ == "__main__":
    key = jax.random.PRNGKey(0)
    k_x, k_p = jax.random.split(key)

    batch, input_dim, output_dim = 8, 16, 8
    x = jax.random.normal(k_x, (batch, input_dim), dtype=jnp.float32)
    params = init_params(k_p, input_dim, output_dim)
    padded = pad_params(params)

    out = actor_forward(x, padded, output_dim)
    out = jax.block_until_ready(out)

    ref = reference_forward(x, params)
    assert out.shape == (batch, output_dim)
    # bf16 matmul operands + bf16 output store => looser tolerance than pure f32
    assert jnp.allclose(out, ref, atol=1e-2, rtol=0.0), jnp.max(jnp.abs(out - ref))
    # exact divide in-kernel; only bf16 output rounding perturbs the row sums
    assert jnp.allclose(jnp.sum(out, axis=-1), jnp.ones((batch,)), atol=1e-2)

    print("KERNEL_OK")
</pallas_src>

<mosaic_0001>
module attributes {stable_mosaic.version = 11 : i64} {
  func.func @actor_kernel(%arg0: i32, %arg1: memref<16x16xbf16, #tpu.memory_space<vmem>>, %arg2: memref<16x128xbf16, #tpu.memory_space<vmem>>, %arg3: memref<1x128xf32, #tpu.memory_space<vmem>>, %arg4: memref<128x128xbf16, #tpu.memory_space<vmem>>, %arg5: memref<1x128xf32, #tpu.memory_space<vmem>>, %arg6: memref<128x128xbf16, #tpu.memory_space<vmem>>, %arg7: memref<1x128xf32, #tpu.memory_space<vmem>>, %arg8: memref<16x128xbf16, #tpu.memory_space<vmem>>) attributes {dimension_semantics = [#tpu.dimension_semantics<parallel>], iteration_bounds = array<i64: 1>, scalar_prefetch = 0 : i64, scratch_operands = 0 : i64, tpu.core_type = #tpu.core_type<tc>, window_params = [{transform_indices = @transform_0, window_bounds = array<i64: 16, 16>}, {pipeline_mode = #tpu.pipeline_mode<synchronous>, transform_indices = @transform_1, window_bounds = array<i64: 16, 128>}, {pipeline_mode = #tpu.pipeline_mode<synchronous>, transform_indices = @transform_2, window_bounds = array<i64: 1, 128>}, {pipeline_mode = #tpu.pipeline_mode<synchronous>, transform_indices = @transform_3, window_bounds = array<i64: 128, 128>}, {pipeline_mode = #tpu.pipeline_mode<synchronous>, transform_indices = @transform_4, window_bounds = array<i64: 1, 128>}, {pipeline_mode = #tpu.pipeline_mode<synchronous>, transform_indices = @transform_5, window_bounds = array<i64: 128, 128>}, {pipeline_mode = #tpu.pipeline_mode<synchronous>, transform_indices = @transform_6, window_bounds = array<i64: 1, 128>}, {transform_indices = @transform_7, window_bounds = array<i64: 16, 128>}]} {
    %c0 = arith.constant 0 : index
    %c0_0 = arith.constant 0 : index
    %0 = vector.load %arg1[%c0, %c0_0] : memref<16x16xbf16, #tpu.memory_space<vmem>>, vector<16x16xbf16>
    %c0_1 = arith.constant 0 : index
    %c0_2 = arith.constant 0 : index
    %1 = vector.load %arg3[%c0_1, %c0_2] : memref<1x128xf32, #tpu.memory_space<vmem>>, vector<1x128xf32>
    %c0_3 = arith.constant 0 : index
    %c0_4 = arith.constant 0 : index
    %2 = vector.load %arg5[%c0_3, %c0_4] : memref<1x128xf32, #tpu.memory_space<vmem>>, vector<1x128xf32>
    %c0_5 = arith.constant 0 : index
    %c0_6 = arith.constant 0 : index
    %3 = vector.load %arg7[%c0_5, %c0_6] : memref<1x128xf32, #tpu.memory_space<vmem>>, vector<1x128xf32>
    %c0_7 = arith.constant 0 : index
    %c0_8 = arith.constant 0 : index
    %4 = vector.load %arg2[%c0_7, %c0_8] : memref<16x128xbf16, #tpu.memory_space<vmem>>, vector<16x128xbf16>
    %cst = arith.constant dense<0.000000e+00> : vector<16x128xf32>
    %5 = tpu.matmul %0, %4, %cst {dimension_numbers = #tpu.dot_dimension_numbers<[1], [0], [0], [1], [0, 0, 1, 1], [], []>} : vector<16x16xbf16>, vector<16x128xbf16>, vector<16x128xf32> -> vector<16x128xf32>
    %6 = vector.broadcast %1 : vector<1x128xf32> to vector<16x128xf32>
    %7 = arith.addf %5, %6 : vector<16x128xf32>
    %cst_9 = arith.constant 0.000000e+00 : f32
    %8 = vector.broadcast %cst_9 : f32 to vector<16x128xf32>
    %9 = arith.maximumf %7, %8 : vector<16x128xf32>
    %10 = arith.truncf %9 : vector<16x128xf32> to vector<16x128xbf16>
    %c0_10 = arith.constant 0 : index
    %c0_11 = arith.constant 0 : index
    %11 = vector.load %arg4[%c0_10, %c0_11] : memref<128x128xbf16, #tpu.memory_space<vmem>>, vector<128x128xbf16>
    %cst_12 = arith.constant dense<0.000000e+00> : vector<16x128xf32>
    %12 = tpu.matmul %10, %11, %cst_12 {dimension_numbers = #tpu.dot_dimension_numbers<[1], [0], [0], [1], [0, 0, 1, 1], [], []>} : vector<16x128xbf16>, vector<128x128xbf16>, vector<16x128xf32> -> vector<16x128xf32>
    %13 = vector.broadcast %2 : vector<1x128xf32> to vector<16x128xf32>
    %14 = arith.addf %12, %13 : vector<16x128xf32>
    %cst_13 = arith.constant 0.000000e+00 : f32
    %15 = vector.broadcast %cst_13 : f32 to vector<16x128xf32>
    %16 = arith.maximumf %14, %15 : vector<16x128xf32>
    %17 = arith.truncf %16 : vector<16x128xf32> to vector<16x128xbf16>
    %c0_14 = arith.constant 0 : index
    %c0_15 = arith.constant 0 : index
    %18 = vector.load %arg6[%c0_14, %c0_15] : memref<128x128xbf16, #tpu.memory_space<vmem>>, vector<128x128xbf16>
    %cst_16 = arith.constant dense<0.000000e+00> : vector<16x128xf32>
    %19 = tpu.matmul %17, %18, %cst_16 {dimension_numbers = #tpu.dot_dimension_numbers<[1], [0], [0], [1], [0, 0, 1, 1], [], []>} : vector<16x128xbf16>, vector<128x128xbf16>, vector<16x128xf32> -> vector<16x128xf32>
    %20 = vector.broadcast %3 : vector<1x128xf32> to vector<16x128xf32>
    %21 = arith.addf %19, %20 : vector<16x128xf32>
    %cst_17 = arith.constant dense<0xFF800000> : vector<16xf32>
    %22 = vector.multi_reduction <maximumf>, %21, %cst_17 [1] : vector<16x128xf32> to vector<16xf32>
    %23 = vector.shape_cast %22 : vector<16xf32> to vector<16x1xf32>
    %24 = vector.broadcast %23 : vector<16x1xf32> to vector<16x128xf32>
    %25 = arith.subf %21, %24 : vector<16x128xf32>
    %26 = math.exp %25 : vector<16x128xf32>
    %cst_18 = arith.constant dense<0.000000e+00> : vector<16xf32>
    %27 = vector.multi_reduction <add>, %26, %cst_18 [1] : vector<16x128xf32> to vector<16xf32>
    %28 = vector.shape_cast %27 : vector<16xf32> to vector<16x1xf32>
    %29 = vector.broadcast %28 : vector<16x1xf32> to vector<16x128xf32>
    %30 = arith.divf %26, %29 : vector<16x128xf32>
    %31 = arith.truncf %30 : vector<16x128xf32> to vector<16x128xbf16>
    %c0_19 = arith.constant 0 : index
    %c0_20 = arith.constant 0 : index
    %32 = vector.load %arg8[%c0_19, %c0_20] : memref<16x128xbf16, #tpu.memory_space<vmem>>, vector<16x128xbf16>
    tpu.vector_store %arg8[%c0_19, %c0_20], %31 {strides = array<i32>} : memref<16x128xbf16, #tpu.memory_space<vmem>>, vector<16x128xbf16>,
    return
  }
  func.func @transform_0(%arg0: i32) -> (i32, i32) {
    %c0_i32 = arith.constant 0 : i32
    %c0_i32_0 = arith.constant 0 : i32
    return %arg0, %c0_i32 : i32, i32
  }
  func.func @transform_1(%arg0: i32) -> (i32, i32) {
    %c0_i32 = arith.constant 0 : i32
    %c0_i32_0 = arith.constant 0 : i32
    %c0_i32_1 = arith.constant 0 : i32
    return %c0_i32, %c0_i32_0 : i32, i32
  }
  func.func @transform_2(%arg0: i32) -> (i32, i32) {
    %c0_i32 = arith.constant 0 : i32
    %c0_i32_0 = arith.constant 0 : i32
    %c0_i32_1 = arith.constant 0 : i32
    return %c0_i32, %c0_i32_0 : i32, i32
  }
  func.func @transform_3(%arg0: i32) -> (i32, i32) {
    %c0_i32 = arith.constant 0 : i32
    %c0_i32_0 = arith.constant 0 : i32
    %c0_i32_1 = arith.constant 0 : i32
    return %c0_i32, %c0_i32_0 : i32, i32
  }
  func.func @transform_4(%arg0: i32) -> (i32, i32) {
    %c0_i32 = arith.constant 0 : i32
    %c0_i32_0 = arith.constant 0 : i32
    %c0_i32_1 = arith.constant 0 : i32
    return %c0_i32, %c0_i32_0 : i32, i32
  }
  func.func @transform_5(%arg0: i32) -> (i32, i32) {
    %c0_i32 = arith.constant 0 : i32
    %c0_i32_0 = arith.constant 0 : i32
    %c0_i32_1 = arith.constant 0 : i32
    return %c0_i32, %c0_i32_0 : i32, i32
  }
  func.func @transform_6(%arg0: i32) -> (i32, i32) {
    %c0_i32 = arith.constant 0 : i32
    %c0_i32_0 = arith.constant 0 : i32
    %c0_i32_1 = arith.constant 0 : i32
    return %c0_i32, %c0_i32_0 : i32, i32
  }
  func.func @transform_7(%arg0: i32) -> (i32, i32) {
    %c0_i32 = arith.constant 0 : i32
    %c0_i32_0 = arith.constant 0 : i32
    return %arg0, %c0_i32 : i32, i32
  }
}

</mosaic_0001>

<llo_original>
// kernel: actor_forward.1
$region0: #{actor_forward.1}
  #allocation0 [shape = 'u32[]', space=smem, size = 0x4, offset = 0x4, fixed_abs, tag = 'smem constant byte address 0x4 - core index']
  #allocation1 [shape = 'u32[144,128]{1,0:T(1,128)}', space=vmem, size = 0x12000, scoped, tag = 'internal scratch']
  %s0 = inlined_call_operand.vmem [shape: bf16[16,16], index: 0, kind: input, shape index: {}]
  %s1 = inlined_call_operand.vmem [shape: bf16[16,128], index: 1, kind: input, shape index: {}]
  %s2 = inlined_call_operand.vmem [shape: f32[1,128], index: 2, kind: input, shape index: {}]
  %s3 = inlined_call_operand.hbm [shape: bf16[128,128], index: 3, kind: input, shape index: {}]
  %s4 = inlined_call_operand.vmem [shape: f32[1,128], index: 4, kind: input, shape index: {}]
  %s5 = inlined_call_operand.hbm [shape: bf16[128,128], index: 5, kind: input, shape index: {}]
  %s6 = inlined_call_operand.vmem [shape: f32[1,128], index: 6, kind: input, shape index: {}]
  %s7 = inlined_call_operand.vmem [shape: bf16[16,128], index: 7, kind: output, shape index: {}]
  %s8 = sld [smem:[#allocation0]]
  $region46: #{actor_forward.1} parent=0
    _
  %s10 = ssub.s32 1, %s8
  %s11 = scalar_select 0, %s10, %s8
  $region1: #{actor_forward.1} parent=0
    #allocation2 [shape = 'u8[32768]{0}', space=vmem, size = 0x8000, scoped, tag = 'input window, operand 3, single buffered']
    #allocation3 [shape = 's32[1]{0}', space=sflag, size = 0x4, scoped, tag = 'scoped memory for actor_forward.1']
    #allocation4 [shape = 'u8[32768]{0}', space=vmem, size = 0x8000, scoped, tag = 'input window, operand 5, single buffered']
    #allocation5 [shape = 's32[1]{0}', space=sflag, size = 0x4, scoped, tag = 'scoped memory for actor_forward.1']
    %12 = vsyncpa [#allocation3], 0
    %13 = vsyncpa [#allocation5], 0
    // Predicated region
    $region2: #{actor_forward.1} parent=1 // pred_check
      _
    $region3: #{actor_forward.1} parent=1 // pred_check_branch
      %15 = sbr.rel (0) target = $region5
    $region4: #{actor_forward.1} parent=1 // pred_region
      _
    $region5: #{actor_forward.1} parent=1 // pred_fallthru
      _
    // Predicated region
    $region6: #{actor_forward.1} parent=1 // pred_check
      _
    $region7: #{actor_forward.1} parent=1 // pred_check_branch
      %17 = sbr.rel (0) target = $region9
    $region8: #{actor_forward.1} parent=1 // pred_region
      _
    $region9: #{actor_forward.1} parent=1 // pred_fallthru
      _
    // Predicated region
    $region10: #{actor_forward.1} parent=1 // pred_check
      _
    $region11: #{actor_forward.1} parent=1 // pred_check_branch
      %19 = sbr.rel (0) target = $region13
    $region12: #{actor_forward.1} parent=1 // pred_region
      _
    $region13: #{actor_forward.1} parent=1 // pred_fallthru
      _
    // Predicated region
    $region14: #{actor_forward.1} parent=1 // pred_check
      _
    $region15: #{actor_forward.1} parent=1 // pred_check_branch
      %21 = sbr.rel (0) target = $region17
    $region16: #{actor_forward.1} parent=1 // pred_region
      %s23 = ssub.s32 1024, 1024
      %24 = vsyncadd [#allocation3], %s23
      %s25 = sshll.u32 [#allocation2], 4
      %s26 = int_to_ptr.vmem [resolvable:$true] %s25
      %31 = dma.hbm_to_vmem [thread:$0]  %s3, 1024, %s26, [#allocation3], 64, 64, 4
    $region17: #{actor_forward.1} parent=1 // pred_fallthru
      _
    // Predicated region
    $region18: #{actor_forward.1} parent=1 // pred_check
      _
    $region19: #{actor_forward.1} parent=1 // pred_check_branch
      %33 = sbr.rel (0) target = $region21
    $region20: #{actor_forward.1} parent=1 // pred_region
      _
    $region21: #{actor_forward.1} parent=1 // pred_fallthru
      _
    // Predicated region
    $region22: #{actor_forward.1} parent=1 // pred_check
      _
    $region23: #{actor_forward.1} parent=1 // pred_check_branch
      %35 = sbr.rel (0) target = $region25
    $region24: #{actor_forward.1} parent=1 // pred_region
      %s37 = ssub.s32 1024, 1024
      %38 = vsyncadd [#allocation5], %s37
      %s39 = sshll.u32 [#allocation4], 4
      %s40 = int_to_ptr.vmem [resolvable:$true] %s39
      %45 = dma.hbm_to_vmem [thread:$0]  %s5, 1024, %s40, [#allocation5], 64, 64, 4
    $region25: #{actor_forward.1} parent=1 // pred_fallthru
      _
    // Predicated region
    $region26: #{actor_forward.1} parent=1 // pred_check
      _
    $region27: #{actor_forward.1} parent=1 // pred_check_branch
      %47 = sbr.rel (0) target = $region29
    $region28: #{actor_forward.1} parent=1 // pred_region
      _
    $region29: #{actor_forward.1} parent=1 // pred_fallthru
      _
    // Predicated region
    $region30: #{actor_forward.1} parent=1 // pred_check
      _
    $region31: #{actor_forward.1} parent=1 // pred_check_branch
      %49 = sbr.rel (0) target = $region33
    $region32: #{actor_forward.1} parent=1 // pred_region
      %50 = dma.done [#allocation3], 1024
    $region33: #{actor_forward.1} parent=1 // pred_fallthru
      _
    // Predicated region
    $region34: #{actor_forward.1} parent=1 // pred_check
      _
    $region35: #{actor_forward.1} parent=1 // pred_check_branch
      %52 = sbr.rel (0) target = $region37
    $region36: #{actor_forward.1} parent=1 // pred_region
      %53 = dma.done [#allocation5], 1024
    $region37: #{actor_forward.1} parent=1 // pred_fallthru
      _
    %v55 = vld [vmem:[%s0] sm:$0xf]
    %v56 = vld [vmem:[%s0 + $0x4] sm:$0xf]
    %v57 = vld [vmem:[%s2] sm:$0x1]
    %v58 = vld [vmem:[%s4] sm:$0x1]
    %v59 = vld [vmem:[%s6] sm:$0x1]
    %v60 = vld [vmem:[%s1] sm:$0xf]
    %v61 = vld [vmem:[%s1 + $0x4] sm:$0xf]
    %v63 = vlaneseq
    %v64 = vshrl.u32 %v63, 7
    %v65 = vsub.s32 0, %v64
    %v66 = vrot.slane %v57, %v65
    %v70 = vunpack.c.l.b16 %v55
    %v71 = vunpack.c.l.b16 %v56
    %v72 = vpack.c.b16 %v71, %v70
    %v75 = vunpack.c.l.b16 %v60
    %v76 = vunpack.c.l.b16 %v61
    %v77 = vpack.c.b16 %v76, %v75
    %vm79 = vcmask 130048
    %v81 = vsel %vm79, %v72, 0
    %83 = vmatprep.subr.bf16.mxu0 0
    %84 = vmatpush1.bf16.msra.mxu0 %v77
    %85 = vmatprep.subr.bf16.mxu0 0
    %86 = vmatpush1.bf16.msra.mxu0 0
    %87 = vmatprep.subr.bf16.mxu0 0
    %88 = vmatpush1.bf16.msra.mxu0 0
    %89 = vmatprep.subr.bf16.mxu0 0
    %90 = vmatpush1.bf16.msra.mxu0 0
    %91 = vmatprep.subr.bf16.mxu0 0
    %92 = vmatpush1.bf16.msra.mxu0 0
    %93 = vmatprep.subr.bf16.mxu0 0
    %94 = vmatpush1.bf16.msra.mxu0 0
    %95 = vmatprep.subr.bf16.mxu0 0
    %96 = vmatpush1.bf16.msra.mxu0 0
    %97 = vmatprep.subr.bf16.mxu0 0
    %98 = vmatpush1.bf16.msra.mxu0 0
    %99 = vmatprep.subr.bf16.mxu0 0
    %100 = vmatpush1.bf16.msra.mxu0 0
    %101 = vmatprep.subr.bf16.mxu0 0
    %102 = vmatpush1.bf16.msra.mxu0 0
    %103 = vmatprep.subr.bf16.mxu0 0
    %104 = vmatpush1.bf16.msra.mxu0 0
    %105 = vmatprep.subr.bf16.mxu0 0
    %106 = vmatpush1.bf16.msra.mxu0 0
    %107 = vmatprep.subr.bf16.mxu0 0
    %108 = vmatpush1.bf16.msra.mxu0 0
    %109 = vmatprep.subr.bf16.mxu0 0
    %110 = vmatpush1.bf16.msra.mxu0 0
    %111 = vmatprep.subr.bf16.mxu0 0
    %112 = vmatpush1.bf16.msra.mxu0 0
    %113 = vmatprep.subr.bf16.mxu0 0
    %114 = vmatpush1.bf16.msra.mxu0 0
    %115 = vmatprep.mubr.bf16.mxu0 0
    %116 = vmatmul.mubr.bf16.gmra.mrb[0].mxu0 %v81
    %v117 = vpop.f32.mrb[0].mxu0
    %v118 = vadd.f32 %v66, %v117
    %v119 = vpop.f32.mrb[0].mxu0
    %v120 = vpop.f32.mrb[0].mxu0
    %v121 = vadd.f32 %v66, %v120
    %v122 = vpop.f32.mrb[0].mxu0
    %123 = vdwg.mxu0
    %v124 = vmax.f32 %v118, 0.0
    %v125 = vmax.f32 %v121, 0.0
    %v126 = vpack.c.bf16 %v125, %v124
    %v127 = vld [vmem:[#allocation2] sm:$0xf]
    %v128 = vld [vmem:[#allocation2 + $0x4] sm:$0xf]
    %v129 = vld [vmem:[#allocation2 + $0x8] sm:$0xf]
    %v130 = vld [vmem:[#allocation2 + $0xc] sm:$0xf]
    %v131 = vld [vmem:[#allocation2 + $0x10] sm:$0xf]
    %v132 = vld [vmem:[#allocation2 + $0x14] sm:$0xf]
    %v133 = vld [vmem:[#allocation2 + $0x18] sm:$0xf]
    %v134 = vld [vmem:[#allocation2 + $0x1c] sm:$0xf]
    %v135 = vld [vmem:[#allocation2 + $0x20] sm:$0xf]
    %v136 = vld [vmem:[#allocation2 + $0x24] sm:$0xf]
    %v137 = vld [vmem:[#allocation2 + $0x28] sm:$0xf]
    %v138 = vld [vmem:[#allocation2 + $0x2c] sm:$0xf]
    %v139 = vld [vmem:[#allocation2 + $0x30] sm:$0xf]
    %v140 = vld [vmem:[#allocation2 + $0x34] sm:$0xf]
    %v141 = vld [vmem:[#allocation2 + $0x38] sm:$0xf]
    %v142 = vld [vmem:[#allocation2 + $0x3c] sm:$0xf]
    %v144 = vlaneseq
    %v145 = vshrl.u32 %v144, 7
    %v146 = vsub.s32 0, %v145
    %v147 = vrot.slane %v58, %v146
    %v165 = vunpack.c.l.b16 %v127
    %v166 = vunpack.c.l.b16 %v128
    %v167 = vunpack.c.l.b16 %v129
    %v168 = vunpack.c.l.b16 %v130
    %v169 = vunpack.c.l.b16 %v131
    %v170 = vunpack.c.l.b16 %v132
    %v171 = vunpack.c.l.b16 %v133
    %v172 = vunpack.c.l.b16 %v134
    %v173 = vunpack.c.l.b16 %v135
    %v174 = vunpack.c.l.b16 %v136
    %v175 = vunpack.c.l.b16 %v137
    %v176 = vunpack.c.l.b16 %v138
    %v177 = vunpack.c.l.b16 %v139
    %v178 = vunpack.c.l.b16 %v140
    %v179 = vunpack.c.l.b16 %v141
    %v180 = vunpack.c.l.b16 %v142
    %v181 = vpack.c.b16 %v166, %v165
    %v182 = vpack.c.b16 %v168, %v167
    %v183 = vpack.c.b16 %v170, %v169
    %v184 = vpack.c.b16 %v172, %v171
    %v185 = vpack.c.b16 %v174, %v173
    %v186 = vpack.c.b16 %v176, %v175
    %v187 = vpack.c.b16 %v178, %v177
    %v188 = vpack.c.b16 %v180, %v179
    %197 = vmatprep.subr.bf16.mxu0 0
    %198 = vmatpush1.bf16.msra.mxu0 %v181
    %199 = vmatprep.subr.bf16.mxu0 0
    %200 = vmatpush1.bf16.msra.mxu0 %v182
    %201 = vmatprep.subr.bf16.mxu0 0
    %202 = vmatpush1.bf16.msra.mxu0 %v183
    %203 = vmatprep.subr.bf16.mxu0 0
    %204 = vmatpush1.bf16.msra.mxu0 %v184
    %205 = vmatprep.subr.bf16.mxu0 0
    %206 = vmatpush1.bf16.msra.mxu0 %v185
    %207 = vmatprep.subr.bf16.mxu0 0
    %208 = vmatpush1.bf16.msra.mxu0 %v186
    %209 = vmatprep.subr.bf16.mxu0 0
    %210 = vmatpush1.bf16.msra.mxu0 %v187
    %211 = vmatprep.subr.bf16.mxu0 0
    %212 = vmatpush1.bf16.msra.mxu0 %v188
    %213 = vmatprep.subr.bf16.mxu0 0
    %214 = vmatpush1.bf16.msra.mxu0 0
    %215 = vmatprep.subr.bf16.mxu0 0
    %216 = vmatpush1.bf16.msra.mxu0 0
    %217 = vmatprep.subr.bf16.mxu0 0
    %218 = vmatpush1.bf16.msra.mxu0 0
    %219 = vmatprep.subr.bf16.mxu0 0
    %220 = vmatpush1.bf16.msra.mxu0 0
    %221 = vmatprep.subr.bf16.mxu0 0
    %222 = vmatpush1.bf16.msra.mxu0 0
    %223 = vmatprep.subr.bf16.mxu0 0
    %224 = vmatpush1.bf16.msra.mxu0 0
    %225 = vmatprep.subr.bf16.mxu0 0
    %226 = vmatpush1.bf16.msra.mxu0 0
    %227 = vmatprep.subr.bf16.mxu0 0
    %228 = vmatpush1.bf16.msra.mxu0 0
    %229 = vmatprep.mubr.bf16.mxu0 0
    %230 = vmatmul.mubr.bf16.gmra.mrb[0].mxu0 %v126
    %v231 = vpop.f32.mrb[0].mxu0
    %v232 = vadd.f32 %v147, %v231
    %v233 = vpop.f32.mrb[0].mxu0
    %v234 = vpop.f32.mrb[0].mxu0
    %v235 = vadd.f32 %v147, %v234
    %v236 = vpop.f32.mrb[0].mxu0
    %237 = vdwg.mxu0
    %v238 = vmax.f32 %v232, 0.0
    %v239 = vmax.f32 %v235, 0.0
    %v240 = vpack.c.bf16 %v239, %v238
    %v241 = vld [vmem:[#allocation4] sm:$0xf]
    %v242 = vld [vmem:[#allocation4 + $0x4] sm:$0xf]
    %v243 = vld [vmem:[#allocation4 + $0x8] sm:$0xf]
    %v244 = vld [vmem:[#allocation4 + $0xc] sm:$0xf]
    %v245 = vld [vmem:[#allocation4 + $0x10] sm:$0xf]
    %v246 = vld [vmem:[#allocation4 + $0x14] sm:$0xf]
    %v247 = vld [vmem:[#allocation4 + $0x18] sm:$0xf]
    %v248 = vld [vmem:[#allocation4 + $0x1c] sm:$0xf]
    %v249 = vld [vmem:[#allocation4 + $0x20] sm:$0xf]
    %v250 = vld [vmem:[#allocation4 + $0x24] sm:$0xf]
    %v251 = vld [vmem:[#allocation4 + $0x28] sm:$0xf]
    %v252 = vld [vmem:[#allocation4 + $0x2c] sm:$0xf]
    %v253 = vld [vmem:[#allocation4 + $0x30] sm:$0xf]
    %v254 = vld [vmem:[#allocation4 + $0x34] sm:$0xf]
    %v255 = vld [vmem:[#allocation4 + $0x38] sm:$0xf]
    %v256 = vld [vmem:[#allocation4 + $0x3c] sm:$0xf]
    %v258 = vlaneseq
    %v259 = vshrl.u32 %v258, 7
    %v260 = vsub.s32 0, %v259
    %v261 = vrot.slane %v59, %v260
    %v279 = vunpack.c.l.b16 %v241
    %v280 = vunpack.c.l.b16 %v242
    %v281 = vunpack.c.l.b16 %v243
    %v282 = vunpack.c.l.b16 %v244
    %v283 = vunpack.c.l.b16 %v245
    %v284 = vunpack.c.l.b16 %v246
    %v285 = vunpack.c.l.b16 %v247
    %v286 = vunpack.c.l.b16 %v248
    %v287 = vunpack.c.l.b16 %v249
    %v288 = vunpack.c.l.b16 %v250
    %v289 = vunpack.c.l.b16 %v251
    %v290 = vunpack.c.l.b16 %v252
    %v291 = vunpack.c.l.b16 %v253
    %v292 = vunpack.c.l.b16 %v254
    %v293 = vunpack.c.l.b16 %v255
    %v294 = vunpack.c.l.b16 %v256
    %v295 = vpack.c.b16 %v280, %v279
    %v296 = vpack.c.b16 %v282, %v281
    %v297 = vpack.c.b16 %v284, %v283
    %v298 = vpack.c.b16 %v286, %v285
    %v299 = vpack.c.b16 %v288, %v287
    %v300 = vpack.c.b16 %v290, %v289
    %v301 = vpack.c.b16 %v292, %v291
    %v302 = vpack.c.b16 %v294, %v293
    %311 = vmatprep.subr.bf16.mxu0 0
    %312 = vmatpush1.bf16.msra.mxu0 %v295
    %313 = vmatprep.subr.bf16.mxu0 0
    %314 = vmatpush1.bf16.msra.mxu0 %v296
    %315 = vmatprep.subr.bf16.mxu0 0
    %316 = vmatpush1.bf16.msra.mxu0 %v297
    %317 = vmatprep.subr.bf16.mxu0 0
    %318 = vmatpush1.bf16.msra.mxu0 %v298
    %319 = vmatprep.subr.bf16.mxu0 0
    %320 = vmatpush1.bf16.msra.mxu0 %v299
    %321 = vmatprep.subr.bf16.mxu0 0
    %322 = vmatpush1.bf16.msra.mxu0 %v300
    %323 = vmatprep.subr.bf16.mxu0 0
    %324 = vmatpush1.bf16.msra.mxu0 %v301
    %325 = vmatprep.subr.bf16.mxu0 0
    %326 = vmatpush1.bf16.msra.mxu0 %v302
    %327 = vmatprep.subr.bf16.mxu0 0
    %328 = vmatpush1.bf16.msra.mxu0 0
    %329 = vmatprep.subr.bf16.mxu0 0
    %330 = vmatpush1.bf16.msra.mxu0 0
    %331 = vmatprep.subr.bf16.mxu0 0
    %332 = vmatpush1.bf16.msra.mxu0 0
    %333 = vmatprep.subr.bf16.mxu0 0
    %334 = vmatpush1.bf16.msra.mxu0 0
    %335 = vmatprep.subr.bf16.mxu0 0
    %336 = vmatpush1.bf16.msra.mxu0 0
    %337 = vmatprep.subr.bf16.mxu0 0
    %338 = vmatpush1.bf16.msra.mxu0 0
    %339 = vmatprep.subr.bf16.mxu0 0
    %340 = vmatpush1.bf16.msra.mxu0 0
    %341 = vmatprep.subr.bf16.mxu0 0
    %342 = vmatpush1.bf16.msra.mxu0 0
    %343 = vmatprep.mubr.bf16.mxu0 0
    %344 = vmatmul.mubr.bf16.gmra.mrb[0].mxu0 %v240
    %v345 = vpop.f32.mrb[0].mxu0
    %v346 = vadd.f32 %v261, %v345
    %v347 = vpop.f32.mrb[0].mxu0
    %v348 = vpop.f32.mrb[0].mxu0
    %v349 = vadd.f32 %v261, %v348
    %v350 = vpop.f32.mrb[0].mxu0
    %351 = vdwg.mxu0
    %352 = vmax.xlane.f32.xlu0 %v346
    %v353 = vpop.xlane.xlu0 %352
    %354 = vmax.xlane.f32.xlu0 %v349
    %v355 = vpop.xlane.xlu0 %354
    %v356 = vsub.f32 %v346, %v353
    %v357 = vsub.f32 %v349, %v355
    %v358 = vmul.f32 %v356, 1.442695
    %v359 = vpow.pop %v358
    %v360 = vmul.f32 %v357, 1.442695
    %v361 = vpow.pop %v360
    %362 = vadd.xlane.f32.xlu0 %v359
    %v363 = vpop.xlane.xlu0 %362
    %364 = vadd.xlane.f32.xlu0 %v361
    %v365 = vpop.xlane.xlu0 %364
    %v366 = vrcp.pop %v363
    %v367 = vmul.f32 %v359, %v366
    %v368 = vrcp.pop %v365
    %v369 = vmul.f32 %v361, %v368
    %v370 = vpack.c.bf16 %v369, %v367
    %v372 = vunpack.c.l.b16 %v370
    %v373 = vunpack.c.h.b16 %v370
    %v374 = vpack.c.b16 %v372, %v372
    %v375 = vpack.c.b16 %v373, %v373
    %378 = vst [vmem:[%s7] sm:$0xf] %v374
    %379 = vst [vmem:[%s7 + $0x4] sm:$0xf] %v375
    // Predicated region
    $region38: #{actor_forward.1} parent=1 // pred_check
      _
    $region39: #{actor_forward.1} parent=1 // pred_check_branch
      %381 = sbr.rel (0) target = $region41
    $region40: #{actor_forward.1} parent=1 // pred_region
      _
    $region41: #{actor_forward.1} parent=1 // pred_fallthru
      _
    // Predicated region
    $region42: #{actor_forward.1} parent=1 // pred_check
      _
    $region43: #{actor_forward.1} parent=1 // pred_check_branch
      %383 = sbr.rel (0) target = $region45
    $region44: #{actor_forward.1} parent=1 // pred_region
      _
    $region45: #{actor_forward.1} parent=1 // pred_fallthru
      _
    %384 = vsyncpa [#allocation3], 1
    %385 = vsyncpa [#allocation5], 1

</llo_original>
